<compile_context>
chip_gen: v5e
topology: v5e:2x2
jax: 0.10.0
libtpu: 0.0.40
codegen_flags: <defaults>
</compile_context>

<pallas_src>
import jax
import jax.numpy as jnp
from jax.experimental import pallas as pl
from jax.experimental.pallas import tpu as pltpu

KH, KW = 3, 3


def _sign(v):
    one = jnp.ones_like(v)
    return jnp.where(v > 0, one, jnp.where(v < 0, -one, jnp.zeros_like(v)))


def conv_stats_kernel(a_ref, b0_ref, m_ref, conv_ref, stats_ref):
    """Per-image: move0 + sign + 3x3 binary conv as ONE MXU dot + BN partials.

    a_ref    : (1, H+2, (W+2)*Cin)  f32 input padded with -b0 (halo -> sign 0)
    b0_ref   : (1, (W+2)*Cin)       move0 bias tiled along W+2
    m_ref    : (KH*(W+2)*Cin, W*Cout) bf16 block-banded sign(W) matrix
    conv_ref : (1, H, W*Cout)       unscaled conv output (scale folded into BN)
    stats_ref: (1, 1, 2*W*Cout)     lane-packed [sum | sum-of-squares] over H
    """
    H = conv_ref.shape[1]

    # move0 + BinaryActivation; the -b0 halo gives sign(0) = 0 == zero padding.
    a = _sign(a_ref[0] + b0_ref[...])                     # (H+2, (W+2)*Cin)

    # H-only im2col: fuse the 3 dy matmuls into one K = KH*(W+2)*Cin dot.
    a3 = jnp.concatenate([a[0:H, :], a[1:H + 1, :], a[2:H + 2, :]], axis=1)
    a3 = a3.astype(jnp.bfloat16)                          # {-1,0,+1}: exact

    acc = jnp.dot(a3, m_ref[...], preferred_element_type=jnp.float32)  # (H, W*Cout)
    conv_ref[0] = acc

    # BN partial statistics fused with the conv pass, one lane-dense store.
    s = jnp.sum(acc, axis=0, keepdims=True)
    sq = jnp.sum(acc * acc, axis=0, keepdims=True)
    stats_ref[0] = jnp.concatenate([s, sq], axis=1)       # (1, 2*W*Cout)


def epilogue_kernel(conv_ref, x_ref, p_ref, o_ref):
    """BN (batch stats + weight scale + b1 folded) + residual + PReLU + move2.

    conv_ref/x_ref/o_ref: (1, H*W*C) lane-dense rows.
    p_ref               : (4, H*W*C) packed [bn_scale, bn_shift+b1, alpha, b2].
    """
    scale = p_ref[0:1, :]
    shift = p_ref[1:2, :]
    alpha = p_ref[2:3, :]
    b2 = p_ref[3:4, :]
    y = conv_ref[...] * scale + shift + x_ref[...]
    y = jnp.where(y > 0, y, alpha * y)                    # per-channel PReLU
    o_ref[...] = y + b2                                   # move2


def basic_block_forward(x_nchw, w_oihw, b0, gamma, beta, b1, alpha, b2):
    """x_nchw: (N, C, H, W) float32 (PyTorch layout). Returns NCHW."""
    N, Cin, H, W = x_nchw.shape
    Cout = w_oihw.shape[0]
    assert Cin == Cout, "identity residual requires inplanes == planes"
    C = Cout
    f32 = jnp.float32

    b0 = jnp.asarray(b0, f32)
    gamma = jnp.asarray(gamma, f32)
    beta = jnp.asarray(beta, f32)
    b1 = jnp.asarray(b1, f32)
    alpha = jnp.asarray(alpha, f32)
    b2 = jnp.asarray(b2, f32)

    # ---- layout plumbing (wrapper-side) -------------------------------------
    x_nhwc = jnp.transpose(x_nchw, (0, 2, 3, 1)).astype(f32)     # (N,H,W,C)
    x_flat = x_nhwc.reshape(N, H * W * C)                        # lane-dense rows

    # Pad with -b0 so that in-kernel sign(pad + b0) == sign(0) == 0, i.e. zero
    # padding of the *binarized* activation (padding=1 of the conv).
    a_in = jnp.broadcast_to(-b0.reshape(1, 1, 1, C), (N, H + 2, W + 2, C))
    a_in = a_in.at[:, 1:H + 1, 1:W + 1, :].set(x_nhwc)
    a_in = a_in.reshape(N, H + 2, (W + 2) * C)

    b0_t = jnp.tile(b0, W + 2).reshape(1, (W + 2) * C)

    # ---- HardBinaryConv weights: pure sign(W), scale folded into BN ---------
    w = jnp.transpose(w_oihw, (2, 3, 1, 0)).astype(f32)          # (KH,KW,Cin,Cout)
    scale_c = jnp.mean(jnp.abs(w), axis=(0, 1, 2))               # (Cout,)
    sgn_w = jnp.sign(w)                                          # {-1,0,+1}

    # Block-banded (Toeplitz) matrix: conv3x3(pad=1) == A3 @ M with
    #   A3[h, (dy*(W+2)+p)*Cin+ci] = sign-act at padded row h+dy, padded col p
    #   M[(dy*(W+2)+p)*Cin+ci, w*Cout+co] = sign(W)[dy, p-w, ci, co] (0<=p-w<KW)
    P = jnp.zeros((KW, W + 2, W), f32)
    eye_w = jnp.eye(W, dtype=f32)
    for dx in range(KW):
        P = P.at[dx, dx:dx + W, :].set(eye_w)                    # P[dx, w+dx, w] = 1
    M = jnp.einsum('xpw,yxio->ypiwo', P, sgn_w)
    M = M.reshape(KH * (W + 2) * Cin, W * Cout).astype(jnp.bfloat16)  # exact

    # ---- kernel 1: sign-activation + fused binary conv + BN partial stats ---
    conv_out, stats = pl.pallas_call(
        conv_stats_kernel,
        out_shape=(
            jax.ShapeDtypeStruct((N, H, W * Cout), f32),
            jax.ShapeDtypeStruct((N, 1, 2 * W * Cout), f32),
        ),
        grid=(N,),
        in_specs=[
            pl.BlockSpec((1, H + 2, (W + 2) * Cin), lambda n: (n, 0, 0)),
            pl.BlockSpec((1, (W + 2) * Cin), lambda n: (0, 0)),
            pl.BlockSpec((KH * (W + 2) * Cin, W * Cout), lambda n: (0, 0)),
        ],
        out_specs=(
            pl.BlockSpec((1, H, W * Cout), lambda n: (n, 0, 0)),
            pl.BlockSpec((1, 1, 2 * W * Cout), lambda n: (n, 0, 0)),
        ),
        compiler_params=pltpu.CompilerParams(dimension_semantics=("parallel",)),
    )(a_in, b0_t, M)

    # ---- BN batch-stat finalize (C-sized); weight scale and b1 folded -------
    cnt = float(N * H * W)
    st = stats.reshape(N, 2, W, Cout)
    s_raw = st[:, 0].sum(axis=(0, 1))                    # sums of unscaled conv
    sq_raw = st[:, 1].sum(axis=(0, 1))
    mean_raw = s_raw / cnt
    var_raw = jnp.maximum(sq_raw / cnt - mean_raw * mean_raw, 0.0)
    inv_std = jax.lax.rsqrt(scale_c * scale_c * var_raw + 1e-5)
    bn_scale = gamma * inv_std * scale_c                 # applies to unscaled conv
    bn_shift = beta - mean_raw * bn_scale + b1           # move1 folded in

    HWC = H * W * C

    def tile_hw(v):                                      # per-channel -> full row
        return jnp.tile(v, H * W)

    params = jnp.stack(
        [tile_hw(bn_scale), tile_hw(bn_shift), tile_hw(alpha), tile_hw(b2)],
        axis=0)                                          # (4, HWC)

    conv_flat = conv_out.reshape(N, HWC)
    row_spec = pl.BlockSpec((1, HWC), lambda n: (n, 0))

    # ---- kernel 2: BN + residual + move1 + PReLU + move2 (lane-dense) -------
    y = pl.pallas_call(
        epilogue_kernel,
        out_shape=jax.ShapeDtypeStruct((N, HWC), f32),
        grid=(N,),
        in_specs=[row_spec, row_spec, pl.BlockSpec((4, HWC), lambda n: (0, 0))],
        out_specs=row_spec,
        compiler_params=pltpu.CompilerParams(dimension_semantics=("parallel",)),
    )(conv_flat, x_flat, params)

    return jnp.transpose(y.reshape(N, H, W, C), (0, 3, 1, 2))


def _reference(x, w, b0, gamma, beta, b1, alpha, b2):
    """Pure-JAX NCHW reference of the same forward semantics."""
    a = jnp.sign(x + b0.reshape(1, -1, 1, 1))
    scale = jnp.mean(jnp.abs(w), axis=(1, 2, 3), keepdims=True)
    bw = scale * jnp.sign(w)
    conv = jax.lax.conv_general_dilated(
        a, bw, window_strides=(1, 1), padding=((1, 1), (1, 1)),
        dimension_numbers=('NCHW', 'OIHW', 'NCHW'))
    mean = jnp.mean(conv, axis=(0, 2, 3), keepdims=True)
    var = jnp.mean((conv - mean) ** 2, axis=(0, 2, 3), keepdims=True)
    y = (conv - mean) * jax.lax.rsqrt(var + 1e-5) * gamma.reshape(1, -1, 1, 1) \
        + beta.reshape(1, -1, 1, 1)
    y = y + x
    y = y + b1.reshape(1, -1, 1, 1)
    y = jnp.where(y > 0, y, alpha.reshape(1, -1, 1, 1) * y)
    return y + b2.reshape(1, -1, 1, 1)


if __name__ == "__main__":
    key = jax.random.PRNGKey(0)
    kx, kw, kb0, kg, kb, kb1, kb2 = jax.random.split(key, 7)

    N, C, H, W = 2, 4, 16, 16            # inplanes = planes = 4, stride = 1
    x = jax.random.normal(kx, (N, C, H, W), jnp.float32)

    # Deterministic parameter init (shapes from the block's __init__):
    w = jax.random.uniform(kw, (C, C, 3, 3), jnp.float32) * 0.001  # torch.rand*0.001
    b0 = 0.1 * jax.random.normal(kb0, (C,), jnp.float32)           # LearnableBias
    gamma = 1.0 + 0.1 * jax.random.normal(kg, (C,), jnp.float32)   # BN weight
    beta = 0.1 * jax.random.normal(kb, (C,), jnp.float32)          # BN bias
    b1 = 0.1 * jax.random.normal(kb1, (C,), jnp.float32)           # LearnableBias
    alpha = jnp.full((C,), 0.25, jnp.float32)                      # PReLU default
    b2 = 0.1 * jax.random.normal(kb2, (C,), jnp.float32)           # LearnableBias

    y = basic_block_forward(x, w, b0, gamma, beta, b1, alpha, b2)
    jax.block_until_ready(y)

    y_ref = _reference(x, w, b0, gamma, beta, b1, alpha, b2)
    assert y.shape == (N, C, H, W)
    assert bool(jnp.all(jnp.isfinite(y)))
    assert bool(jnp.allclose(y, y_ref, rtol=1e-3, atol=1e-3)), \
        float(jnp.max(jnp.abs(y - y_ref)))
    print("KERNEL_OK")
</pallas_src>

<mosaic_0001>
module attributes {stable_mosaic.version = 11 : i64} {
  func.func @conv_stats_kernel(%arg0: i32, %arg1: memref<1x18x72xf32, #tpu.memory_space<vmem>>, %arg2: memref<1x72xf32, #tpu.memory_space<vmem>>, %arg3: memref<216x64xbf16, #tpu.memory_space<vmem>>, %arg4: memref<1x16x64xf32, #tpu.memory_space<vmem>>, %arg5: memref<1x1x128xf32, #tpu.memory_space<vmem>>) attributes {dimension_semantics = [#tpu.dimension_semantics<parallel>], iteration_bounds = array<i64: 2>, scalar_prefetch = 0 : i64, scratch_operands = 0 : i64, tpu.core_type = #tpu.core_type<tc>, window_params = [{transform_indices = @transform_0, window_bounds = array<i64: 1, 18, 72>}, {pipeline_mode = #tpu.pipeline_mode<synchronous>, transform_indices = @transform_1, window_bounds = array<i64: 1, 72>}, {pipeline_mode = #tpu.pipeline_mode<synchronous>, transform_indices = @transform_2, window_bounds = array<i64: 216, 64>}, {transform_indices = @transform_3, window_bounds = array<i64: 1, 16, 64>}, {transform_indices = @transform_4, window_bounds = array<i64: 1, 1, 128>}]} {
    %c0 = arith.constant 0 : index
    %c0_0 = arith.constant 0 : index
    %c0_1 = arith.constant 0 : index
    %0 = vector.load %arg1[%c0, %c0_0, %c0_1] : memref<1x18x72xf32, #tpu.memory_space<vmem>>, vector<1x18x72xf32>
    %1 = vector.shape_cast %0 : vector<1x18x72xf32> to vector<18x72xf32>
    %c0_2 = arith.constant 0 : index
    %c0_3 = arith.constant 0 : index
    %2 = vector.load %arg2[%c0_2, %c0_3] : memref<1x72xf32, #tpu.memory_space<vmem>>, vector<1x72xf32>
    %3 = vector.broadcast %2 : vector<1x72xf32> to vector<18x72xf32>
    %4 = arith.addf %1, %3 : vector<18x72xf32>
    %cst = arith.constant 1.000000e+00 : f32
    %5 = vector.broadcast %cst : f32 to vector<18x72xf32>
    %cst_4 = arith.constant 0.000000e+00 : f32
    %6 = vector.broadcast %cst_4 : f32 to vector<18x72xf32>
    %7 = arith.cmpf ogt, %4, %6 : vector<18x72xf32>
    %cst_5 = arith.constant 0.000000e+00 : f32
    %8 = vector.broadcast %cst_5 : f32 to vector<18x72xf32>
    %9 = arith.cmpf olt, %4, %8 : vector<18x72xf32>
    %cst_6 = arith.constant 0.000000e+00 : f32
    %10 = vector.broadcast %cst_6 : f32 to vector<18x72xf32>
    %11 = arith.subf %10, %5 : vector<18x72xf32>
    %cst_7 = arith.constant 0.000000e+00 : f32
    %12 = vector.broadcast %cst_7 : f32 to vector<18x72xf32>
    %13 = arith.select %9, %11, %12 : vector<18x72xi1>, vector<18x72xf32>
    %14 = arith.select %7, %5, %13 : vector<18x72xi1>, vector<18x72xf32>
    %15 = vector.extract_strided_slice %14 {offsets = [0, 0], sizes = [16, 72], strides = [1, 1]} : vector<18x72xf32> to vector<16x72xf32>
    %16 = vector.extract_strided_slice %14 {offsets = [1, 0], sizes = [16, 72], strides = [1, 1]} : vector<18x72xf32> to vector<16x72xf32>
    %17 = vector.extract_strided_slice %14 {offsets = [2, 0], sizes = [16, 72], strides = [1, 1]} : vector<18x72xf32> to vector<16x72xf32>
    %18 = tpu.concatenate %15, %16, %17 in 1 : vector<16x72xf32>, vector<16x72xf32>, vector<16x72xf32> -> vector<16x216xf32>
    %19 = arith.truncf %18 : vector<16x216xf32> to vector<16x216xbf16>
    %c0_8 = arith.constant 0 : index
    %c0_9 = arith.constant 0 : index
    %20 = vector.load %arg3[%c0_8, %c0_9] : memref<216x64xbf16, #tpu.memory_space<vmem>>, vector<216x64xbf16>
    %cst_10 = arith.constant dense<0.000000e+00> : vector<16x64xf32>
    %21 = tpu.matmul %19, %20, %cst_10 {dimension_numbers = #tpu.dot_dimension_numbers<[1], [0], [0], [1], [0, 0, 1, 1], [], []>} : vector<16x216xbf16>, vector<216x64xbf16>, vector<16x64xf32> -> vector<16x64xf32>
    %c0_11 = arith.constant 0 : index
    %c0_12 = arith.constant 0 : index
    %c0_13 = arith.constant 0 : index
    %22 = vector.load %arg4[%c0_11, %c0_12, %c0_13] : memref<1x16x64xf32, #tpu.memory_space<vmem>>, vector<1x16x64xf32>
    %23 = vector.shape_cast %22 : vector<1x16x64xf32> to vector<16x64xf32>
    %24 = vector.shape_cast %21 : vector<16x64xf32> to vector<1x16x64xf32>
    tpu.vector_store %arg4[%c0_11, %c0_12, %c0_13], %24 {strides = array<i32>} : memref<1x16x64xf32, #tpu.memory_space<vmem>>, vector<1x16x64xf32>,
    %cst_14 = arith.constant dense<0.000000e+00> : vector<64xf32>
    %25 = vector.multi_reduction <add>, %21, %cst_14 [0] : vector<16x64xf32> to vector<64xf32>
    %26 = vector.shape_cast %25 : vector<64xf32> to vector<1x64xf32>
    %27 = arith.mulf %21, %21 : vector<16x64xf32>
    %cst_15 = arith.constant dense<0.000000e+00> : vector<64xf32>
    %28 = vector.multi_reduction <add>, %27, %cst_15 [0] : vector<16x64xf32> to vector<64xf32>
    %29 = vector.shape_cast %28 : vector<64xf32> to vector<1x64xf32>
    %30 = tpu.concatenate %26, %29 in 1 : vector<1x64xf32>, vector<1x64xf32> -> vector<1x128xf32>
    %c0_16 = arith.constant 0 : index
    %c0_17 = arith.constant 0 : index
    %c0_18 = arith.constant 0 : index
    %31 = vector.load %arg5[%c0_16, %c0_17, %c0_18] : memref<1x1x128xf32, #tpu.memory_space<vmem>>, vector<1x1x128xf32>
    %32 = vector.shape_cast %31 : vector<1x1x128xf32> to vector<1x128xf32>
    %33 = vector.shape_cast %30 : vector<1x128xf32> to vector<1x1x128xf32>
    tpu.vector_store %arg5[%c0_16, %c0_17, %c0_18], %33 {strides = array<i32>} : memref<1x1x128xf32, #tpu.memory_space<vmem>>, vector<1x1x128xf32>,
    return
  }
  func.func @transform_0(%arg0: i32) -> (i32, i32, i32) {
    %c0_i32 = arith.constant 0 : i32
    %c0_i32_0 = arith.constant 0 : i32
    %c0_i32_1 = arith.constant 0 : i32
    return %arg0, %c0_i32, %c0_i32_0 : i32, i32, i32
  }
  func.func @transform_1(%arg0: i32) -> (i32, i32) {
    %c0_i32 = arith.constant 0 : i32
    %c0_i32_0 = arith.constant 0 : i32
    %c0_i32_1 = arith.constant 0 : i32
    return %c0_i32, %c0_i32_0 : i32, i32
  }
  func.func @transform_2(%arg0: i32) -> (i32, i32) {
    %c0_i32 = arith.constant 0 : i32
    %c0_i32_0 = arith.constant 0 : i32
    %c0_i32_1 = arith.constant 0 : i32
    return %c0_i32, %c0_i32_0 : i32, i32
  }
  func.func @transform_3(%arg0: i32) -> (i32, i32, i32) {
    %c0_i32 = arith.constant 0 : i32
    %c0_i32_0 = arith.constant 0 : i32
    %c0_i32_1 = arith.constant 0 : i32
    return %arg0, %c0_i32, %c0_i32_0 : i32, i32, i32
  }
  func.func @transform_4(%arg0: i32) -> (i32, i32, i32) {
    %c0_i32 = arith.constant 0 : i32
    %c0_i32_0 = arith.constant 0 : i32
    %c0_i32_1 = arith.constant 0 : i32
    return %arg0, %c0_i32, %c0_i32_0 : i32, i32, i32
  }
}

</mosaic_0001>

<llo_original>
// kernel: tpu_custom_call.1
$region0: #{tpu_custom_call.1}
  #allocation0 [shape = 'u32[]', space=smem, size = 0x4, offset = 0x4, fixed_abs, tag = 'smem constant byte address 0x4 - core index']
  #allocation1 [shape = 'u32[72,128]{1,0:T(1,128)}', space=vmem, size = 0x9000, scoped, tag = 'internal scratch']
  %s0 = inlined_call_operand.vmem [shape: f32[2,18,72], index: 0, kind: input, shape index: {}]
  %s1 = inlined_call_operand.vmem [shape: f32[1,72], index: 1, kind: input, shape index: {}]
  %s2 = inlined_call_operand.vmem [shape: bf16[216,64], index: 2, kind: input, shape index: {}]
  %s3 = inlined_call_operand.hbm [shape: f32[2,16,64], index: 3, kind: output, shape index: {0}]
  %s4 = inlined_call_operand.hbm [shape: f32[2,1,128], index: 4, kind: output, shape index: {1}]
  %5 = xla_tuple %s3, %s4
  %s6 = sld [smem:[#allocation0]]
  $region53: #{tpu_custom_call.1} parent=0
    _
  %s8 = ssub.s32 1, %s6
  %s9 = scalar_select 0, %s8, %s6
  $region1: #{tpu_custom_call.1} parent=0
    #allocation2 [shape = 'u8[16384]{0}', space=vmem, size = 0x4000, scoped, tag = 'output window, operand 0']
    #allocation3 [shape = 's32[2]{0}', space=sflag, size = 0x8, scoped, tag = 'scoped memory for tpu_custom_call.1']
    #allocation4 [shape = 'u8[1024]{0}', space=vmem, size = 0x400, scoped, tag = 'output window, operand 1']
    #allocation5 [shape = 's32[2]{0}', space=sflag, size = 0x8, scoped, tag = 'scoped memory for tpu_custom_call.1']
    %10 = vsyncpa [#allocation3], 0
    %s11 = scalar_lea.sflag [#allocation3], 1
    %12 = vsyncpa %s11, 0
    %13 = vsyncpa [#allocation5], 0
    %s14 = scalar_lea.sflag [#allocation5], 1
    %15 = vsyncpa %s14, 0
    loop: start=0, step=1, limit=4
    $region2: #{tpu_custom_call.1} parent=1 // loop_pre_header
      _
    $region3: #{tpu_custom_call.1} parent=1 // loop_header
      %s17 = sphi 0, %s21
      %p18 = scmp.ge.s32.totalorder %s17, 4
      %s27 = sphi 0, %s29
      %s30 = sphi 0, %s27
      %s31 = sphi 0, %s30
      %s47 = sphi 0, %s31
      %s51 = sphi 0, %s51
      %s53 = sphi 0, %s51
      %s54 = sphi 0, %s53
      %s68 = sphi 0, %s54
      %s72 = sphi 0, %s72
      %s74 = sphi 0, %s72
      %s75 = sphi 0, %s74
      %s89 = sphi 0, %s75
      %s95 = sphi 0, %s97
      %s98 = sphi 0, %s95
      %s99 = sphi 0, %s98
      %s115 = sphi 0, %s99
      %s121 = sphi 0, %s123
      %s124 = sphi 0, %s121
      %s125 = sphi 0, %s124
      %s141 = sphi 0, %s125
    $region4: #{tpu_custom_call.1} parent=1 // loop_header_branch
      %20 = sbr.rel (%p18) target = $region8
    $region5: #{tpu_custom_call.1} parent=1 // loop_body
      %s22 = ssub.s32 %s17, 1
      %s23 = ssub.s32 %s17, 2
      %s24 = sadd.s32 %s17, 1
      %s25 = ssub.s32 %s17, %s24
      %p26 = scmp.eq.s32.totalorder %s25, 0
      %s28 = sadd.s32 %s27, 1
      %s29 = scalar_select %p26, %s27, %s28
      %p32 = pneg %p26
      %p33 = scmp.eq.s32.totalorder %s17, 1
      %p34 = por %p32, %p33
      %p35 = scmp.ne.s32.totalorder %s27, %s30
      %p36 = scmp.eq.s32.totalorder %s17, 0
      %p37 = por %p35, %p36
      %p38 = scmp.ne.s32.totalorder %s27, %s30
      %p39 = scmp.eq.s32.totalorder %s22, 1
      %p40 = por %p38, %p39
      %p41 = scmp.ne.s32.totalorder %s30, %s31
      %p42 = scmp.eq.s32.totalorder %s22, 0
      %p43 = por %p41, %p42
      %p44 = scmp.ne.s32.totalorder %s30, %s31
      %p45 = scmp.eq.s32.totalorder %s23, 1
      %p46 = por %p44, %p45
      %p48 = scmp.ne.s32.totalorder %s31, %s47
      %p49 = scmp.eq.s32.totalorder %s23, 0
      %p50 = por %p48, %p49
      %s52 = sadd.s32 %s51, 1
      %p55 = scmp.eq.s32.totalorder %s17, 1
      %p56 = scmp.ne.s32.totalorder %s51, %s53
      %p57 = scmp.eq.s32.totalorder %s17, 0
      %p58 = por %p56, %p57
      %p59 = scmp.ne.s32.totalorder %s51, %s53
      %p60 = scmp.eq.s32.totalorder %s22, 1
      %p61 = por %p59, %p60
      %p62 = scmp.ne.s32.totalorder %s53, %s54
      %p63 = scmp.eq.s32.totalorder %s22, 0
      %p64 = por %p62, %p63
      %p65 = scmp.ne.s32.totalorder %s53, %s54
      %p66 = scmp.eq.s32.totalorder %s23, 1
      %p67 = por %p65, %p66
      %p69 = scmp.ne.s32.totalorder %s54, %s68
      %p70 = scmp.eq.s32.totalorder %s23, 0
      %p71 = por %p69, %p70
      %s73 = sadd.s32 %s72, 1
      %p76 = scmp.eq.s32.totalorder %s17, 1
      %p77 = scmp.ne.s32.totalorder %s72, %s74
      %p78 = scmp.eq.s32.totalorder %s17, 0
      %p79 = por %p77, %p78
      %p80 = scmp.ne.s32.totalorder %s72, %s74
      %p81 = scmp.eq.s32.totalorder %s22, 1
      %p82 = por %p80, %p81
      %p83 = scmp.ne.s32.totalorder %s74, %s75
      %p84 = scmp.eq.s32.totalorder %s22, 0
      %p85 = por %p83, %p84
      %p86 = scmp.ne.s32.totalorder %s74, %s75
      %p87 = scmp.eq.s32.totalorder %s23, 1
      %p88 = por %p86, %p87
      %p90 = scmp.ne.s32.totalorder %s75, %s89
      %p91 = scmp.eq.s32.totalorder %s23, 0
      %p92 = por %p90, %p91
      %s93 = ssub.s32 %s17, %s24
      %p94 = scmp.eq.s32.totalorder %s93, 0
      %s96 = sadd.s32 %s95, 1
      %s97 = scalar_select %p94, %s95, %s96
      %p100 = pneg %p94
      %p101 = scmp.eq.s32.totalorder %s17, 1
      %p102 = por %p100, %p101
      %p103 = scmp.ne.s32.totalorder %s95, %s98
      %p104 = scmp.eq.s32.totalorder %s17, 0
      %p105 = por %p103, %p104
      %p106 = scmp.ne.s32.totalorder %s95, %s98
      %p107 = scmp.eq.s32.totalorder %s22, 1
      %p108 = por %p106, %p107
      %p109 = scmp.ne.s32.totalorder %s98, %s99
      %p110 = scmp.eq.s32.totalorder %s22, 0
      %p111 = por %p109, %p110
      %p112 = scmp.ne.s32.totalorder %s98, %s99
      %p113 = scmp.eq.s32.totalorder %s23, 1
      %p114 = por %p112, %p113
      %p116 = scmp.ne.s32.totalorder %s99, %s115
      %p117 = scmp.eq.s32.totalorder %s23, 0
      %p118 = por %p116, %p117
      %s119 = ssub.s32 %s17, %s24
      %p120 = scmp.eq.s32.totalorder %s119, 0
      %s122 = sadd.s32 %s121, 1
      %s123 = scalar_select %p120, %s121, %s122
      %p126 = pneg %p120
      %p127 = scmp.eq.s32.totalorder %s17, 1
      %p128 = por %p126, %p127
      %p129 = scmp.ne.s32.totalorder %s121, %s124
      %p130 = scmp.eq.s32.totalorder %s17, 0
      %p131 = por %p129, %p130
      %p132 = scmp.ne.s32.totalorder %s121, %s124
      %p133 = scmp.eq.s32.totalorder %s22, 1
      %p134 = por %p132, %p133
      %p135 = scmp.ne.s32.totalorder %s124, %s125
      %p136 = scmp.eq.s32.totalorder %s22, 0
      %p137 = por %p135, %p136
      %p138 = scmp.ne.s32.totalorder %s124, %s125
      %p139 = scmp.eq.s32.totalorder %s23, 1
      %p140 = por %p138, %p139
      %p142 = scmp.ne.s32.totalorder %s125, %s141
      %p143 = scmp.eq.s32.totalorder %s23, 0
      %p144 = por %p142, %p143
      %p145 = scmp.le.s32.totalorder 1, %s17
      %p146 = scmp.lt.s32.totalorder %s17, 3
      %p147 = pnand %p145, %p146
      %p148 = pneg %p147
      // Predicated region
      $region9: #{tpu_custom_call.1} parent=5 // pred_check
        _
      $region10: #{tpu_custom_call.1} parent=5 // pred_check_branch
        %150 = sbr.rel (%p147) target = $region12
      $region11: #{tpu_custom_call.1} parent=5 // pred_region
        %s151 = ssub.s32 %s17, 1
        // Predicated region
        $region13: #{tpu_custom_call.1} parent=11 // pred_check
          %p152 = pneg %p64
        $region14: #{tpu_custom_call.1} parent=11 // pred_check_branch
          %154 = sbr.rel (%p152) target = $region16
        $region15: #{tpu_custom_call.1} parent=11 // pred_region
          _
        $region16: #{tpu_custom_call.1} parent=11 // pred_fallthru
          _
        // Predicated region
        $region17: #{tpu_custom_call.1} parent=11 // pred_check
          %p155 = pneg %p85
        $region18: #{tpu_custom_call.1} parent=11 // pred_check_branch
          %157 = sbr.rel (%p155) target = $region20
        $region19: #{tpu_custom_call.1} parent=11 // pred_region
          _
        $region20: #{tpu_custom_call.1} parent=11 // pred_fallthru
          _
      $region12: #{tpu_custom_call.1} parent=5 // pred_fallthru
        _
      %p158 = scmp.lt.s32.totalorder %s17, 2
      // Predicated region
      $region21: #{tpu_custom_call.1} parent=5 // pred_check
        %p159 = pneg %p158
      $region22: #{tpu_custom_call.1} parent=5 // pred_check_branch
        %161 = sbr.rel (%p159) target = $region24
      $region23: #{tpu_custom_call.1} parent=5 // pred_region
        // Predicated region
        $region25: #{tpu_custom_call.1} parent=23 // pred_check
          %p162 = pneg %p37
        $region26: #{tpu_custom_call.1} parent=23 // pred_check_branch
          %164 = sbr.rel (%p162) target = $region28
        $region27: #{tpu_custom_call.1} parent=23 // pred_region
          %p165 = scmp.lt.s32.totalorder %s17, 1
          %s166 = scalar_select %p165, %s17, 1
          %s167 = smul.addr %s166, 3
          %s168 = smul.addr %s167, 8
          %s169 = scalar_lea.vmem %s0, %s168
        $region28: #{tpu_custom_call.1} parent=23 // pred_fallthru
          _
      $region24: #{tpu_custom_call.1} parent=5 // pred_fallthru
        _
      %p170 = scmp.le.s32.totalorder 1, %s17
      %p171 = scmp.lt.s32.totalorder %s17, 3
      %p172 = pnand %p170, %p171
      %p173 = pneg %p172
      // Predicated region
      $region29: #{tpu_custom_call.1} parent=5 // pred_check
        _
      $region30: #{tpu_custom_call.1} parent=5 // pred_check_branch
        %175 = sbr.rel (%p172) target = $region32
      $region31: #{tpu_custom_call.1} parent=5 // pred_region
        %s176 = ssub.s32 %s17, 1
        %p177 = scmp.lt.s32.totalorder %s22, 1
        %s178 = scalar_select %p177, %s22, 1
        %s179 = smul.addr %s178, 3
        %s180 = smul.addr %s179, 8
        %s181 = scalar_lea.vmem %s0, %s180
        %p182 = pneg %p43
        %p183 = pneg %p40
        %p184 = pneg %p64
        %p185 = pneg %p61
        %p186 = pneg %p85
        %p187 = pneg %p82
        %p188 = pneg %p111
        %p189 = pneg %p108
        %s190 = sand.u32 %s98, 1
        %s191 = scalar_lea.sflag [#allocation3], %s190
        %s192 = sand.u32 %s98, 1
        %s193 = smul.addr %s192, 16
        %s194 = scalar_lea.vmem [#allocation2], %s193
        %p195 = pneg %p137
        %p196 = pneg %p134
        %s197 = sand.u32 %s124, 1
        %s198 = scalar_lea.sflag [#allocation5], %s197
        %s199 = sand.u32 %s124, 1
        %s200 = scalar_lea.vmem [#allocation4], %s199
        %p201 = scmp.lt.s32.totalorder %s22, 1
        %s202 = scalar_select %p201, %s22, 1
        %s203 = smul.addr %s202, 3
        %s204 = smul.addr %s203, 8
        %s205 = scalar_lea.vmem %s0, %s204
        %v207 = vld [vmem:[%s205] sm:$0xff]
        %v208 = vld [vmem:[%s205 + $0x8] sm:$0xff]
        %v209 = vld [vmem:[%s205 + $0x10] sm:$0x3]
        %v210 = vld [vmem:[%s1] sm:$0x1]
        %v212 = vperm.slane %v210, 0
        %v214 = vadd.f32 %v207, %v212
        %v215 = vadd.f32 %v208, %v212
        %v216 = vadd.f32 %v209, %v212
        %vm217 = vcmp.gt.f32.partialorder %v214, 0.0
        %vm218 = vcmp.gt.f32.partialorder %v215, 0.0
        %vm219 = vcmp.gt.f32.partialorder %v216, 0.0
        %vm220 = vcmp.lt.f32.partialorder %v214, 0.0
        %vm221 = vcmp.lt.f32.partialorder %v215, 0.0
        %vm222 = vcmp.lt.f32.partialorder %v216, 0.0
        %v223 = vsel %vm220, -1.0, 0.0
        %v224 = vsel %vm221, -1.0, 0.0
        %v225 = vsel %vm222, -1.0, 0.0
        %v226 = vsel %vm217, 1.0, %v223
        %v227 = vsel %vm218, 1.0, %v224
        %v228 = vsel %vm219, 1.0, %v225
        %vm232 = vcmask 1046528
        %v233 = vrot.slane %v226, 1
        %v234 = vrot.slane %v227, 1
        %v235 = vsel %vm232, %v233, %v234
        %v236 = vrot.slane %v228, 1
        %v237 = vsel %vm232, %v234, %v236
        %238 = vrot.lane.b32.xlu0 %v235, 72
        %v239 = vpop.permute.xlu0 %238
        %240 = vrot.lane.b32.xlu0 %v237, 72
        %v241 = vpop.permute.xlu0 %240
        %vm244 = vcmask 1045504
        %v245 = vrot.slane %v226, 2
        %v246 = vrot.slane %v227, 2
        %v247 = vsel %vm244, %v245, %v246
        %v248 = vrot.slane %v228, 2
        %v249 = vsel %vm244, %v246, %v248
        %250 = vrot.lane.b32.xlu0 %v247, 16
        %v251 = vpop.permute.xlu0 %250
        %252 = vrot.lane.b32.xlu0 %v249, 16
        %v253 = vpop.permute.xlu0 %252
        %vm256 = vcmask 588800
        %v257 = vsel %vm256, %v226, %v239
        %v258 = vsel %vm256, %v227, %v241
        %vm259 = vcmask 130048
        %v260 = vsel %vm259, %v239, %v251
        %v261 = vsel %vm259, %v241, %v253
        %v262 = vpack.c.bf16 %v258, %v257
        %v263 = vpack.c.bf16 %v261, %v260
        %v264 = vld [vmem:[%s2] sm:$0xf]
        %v265 = vld [vmem:[%s2 + $0x4] sm:$0xf]
        %v266 = vld [vmem:[%s2 + $0x8] sm:$0xf]
        %v267 = vld [vmem:[%s2 + $0xc] sm:$0xf]
        %v268 = vld [vmem:[%s2 + $0x10] sm:$0xf]
        %v269 = vld [vmem:[%s2 + $0x14] sm:$0xf]
        %v270 = vld [vmem:[%s2 + $0x18] sm:$0xf]
        %v271 = vld [vmem:[%s2 + $0x1c] sm:$0xf]
        %v272 = vld [vmem:[%s2 + $0x20] sm:$0xf]
        %v273 = vld [vmem:[%s2 + $0x24] sm:$0xf]
        %v274 = vld [vmem:[%s2 + $0x28] sm:$0xf]
        %v275 = vld [vmem:[%s2 + $0x2c] sm:$0xf]
        %v276 = vld [vmem:[%s2 + $0x30] sm:$0xf]
        %v277 = vld [vmem:[%s2 + $0x34] sm:$0xf]
        %v278 = vld [vmem:[%s2 + $0x38] sm:$0xf]
        %v279 = vld [vmem:[%s2 + $0x3c] sm:$0xf]
        %v280 = vld [vmem:[%s2 + $0x40] sm:$0xf]
        %v281 = vld [vmem:[%s2 + $0x44] sm:$0xf]
        %v282 = vld [vmem:[%s2 + $0x48] sm:$0xf]
        %v283 = vld [vmem:[%s2 + $0x4c] sm:$0xf]
        %v284 = vld [vmem:[%s2 + $0x50] sm:$0xf]
        %v285 = vld [vmem:[%s2 + $0x54] sm:$0xf]
        %v286 = vld [vmem:[%s2 + $0x58] sm:$0xf]
        %v287 = vld [vmem:[%s2 + $0x5c] sm:$0xf]
        %v288 = vld [vmem:[%s2 + $0x60] sm:$0xf]
        %v289 = vld [vmem:[%s2 + $0x64] sm:$0xf]
        %v290 = vld [vmem:[%s2 + $0x68] sm:$0xf]
        %v318 = vunpack.c.l.b16 %v264
        %v319 = vunpack.c.l.b16 %v265
        %v320 = vunpack.c.l.b16 %v266
        %v321 = vunpack.c.l.b16 %v267
        %v322 = vunpack.c.l.b16 %v268
        %v323 = vunpack.c.l.b16 %v269
        %v324 = vunpack.c.l.b16 %v270
        %v325 = vunpack.c.l.b16 %v271
        %v326 = vunpack.c.l.b16 %v272
        %v327 = vunpack.c.l.b16 %v273
        %v328 = vunpack.c.l.b16 %v274
        %v329 = vunpack.c.l.b16 %v275
        %v330 = vunpack.c.l.b16 %v276
        %v331 = vunpack.c.l.b16 %v277
        %v332 = vunpack.c.l.b16 %v278
        %v333 = vunpack.c.l.b16 %v279
        %v334 = vunpack.c.l.b16 %v280
        %v335 = vunpack.c.l.b16 %v281
        %v336 = vunpack.c.l.b16 %v282
        %v337 = vunpack.c.l.b16 %v283
        %v338 = vunpack.c.l.b16 %v284
        %v339 = vunpack.c.l.b16 %v285
        %v340 = vunpack.c.l.b16 %v286
        %v341 = vunpack.c.l.b16 %v287
        %v342 = vunpack.c.l.b16 %v288
        %v343 = vunpack.c.l.b16 %v289
        %v344 = vunpack.c.l.b16 %v290
        %v345 = vpack.c.b16 %v319, %v318
        %v346 = vpack.c.b16 %v321, %v320
        %v347 = vpack.c.b16 %v323, %v322
        %v348 = vpack.c.b16 %v325, %v324
        %v349 = vpack.c.b16 %v327, %v326
        %v350 = vpack.c.b16 %v329, %v328
        %v351 = vpack.c.b16 %v331, %v330
        %v352 = vpack.c.b16 %v333, %v332
        %v353 = vpack.c.b16 %v335, %v334
        %v354 = vpack.c.b16 %v337, %v336
        %v355 = vpack.c.b16 %v339, %v338
        %v356 = vpack.c.b16 %v341, %v340
        %v357 = vpack.c.b16 %v343, %v342
        %v358 = vpack.c.b16 %v344, %v344
        %vm372 = vcmask 719872
        %v374 = vsel %vm372, %v263, 0
        %vm376 = vcmask 1043456
        %v378 = vsel %vm376, %v358, 0
        %380 = vmatpush.bf16.msra.mxu0 %v352
        %381 = vmatpush.bf16.msra.mxu0 %v351
        %382 = vmatpush.bf16.msra.mxu0 %v350
        %383 = vmatpush.bf16.msra.mxu0 %v349
        %384 = vmatpush.bf16.msra.mxu0 %v348
        %385 = vmatpush.bf16.msra.mxu0 %v347
        %386 = vmatpush.bf16.msra.mxu0 %v346
        %387 = vmatpush.bf16.msra.mxu0 %v345
        %388 = vmatmul.bf16.gmra.mxu0 %v262
        %v389 = vpop.f32.mrf.mxu0
        %v390 = vadd.f32 0.0, %v389
        %v391 = vpop.f32.mrf.mxu0
        %v392 = vadd.f32 0.0, %v391
        %393 = vdwg.mxu0
        %394 = vmatpush.bf16.msra.mxu0 0
        %395 = vmatpush.bf16.msra.mxu0 0
        %396 = vmatpush.bf16.msra.mxu0 %v378
        %397 = vmatpush.bf16.msra.mxu0 %v357
        %398 = vmatpush.bf16.msra.mxu0 %v356
        %399 = vmatpush.bf16.msra.mxu0 %v355
        %400 = vmatpush.bf16.msra.mxu0 %v354
        %401 = vmatpush.bf16.msra.mxu0 %v353
        %402 = vmatmul.bf16.gmra.mxu0 %v374
        %v403 = vpop.f32.mrf.mxu0
        %v404 = vadd.f32 %v390, %v403
        %v405 = vpop.f32.mrf.mxu0
        %v406 = vadd.f32 %v392, %v405
        %407 = vdwg.mxu0
        %vm408 = vcmask 523264
        %409 = vst.msk [vmem:[%s194] sm:$0xff] %vm408, %v404
        %410 = vst.msk [vmem:[%s194 + $0x8] sm:$0xff] %vm408, %v406
        %v411 = vsel %vm408, %v404, 0.0
        %v412 = vsel %vm408, %v406, 0.0
        %v413 = vadd.f32 %v411, %v412
        %v414 = vrot.slane %v413, 4
        %v415 = vadd.f32 %v413, %v414
        %v416 = vrot.slane %v415, 2
        %v417 = vadd.f32 %v415, %v416
        %v418 = vrot.slane %v417, 1
        %v419 = vadd.f32 %v417, %v418
        %v420 = vmul.f32 %v404, %v404
        %v421 = vmul.f32 %v406, %v406
        %v422 = vsel %vm408, %v420, 0.0
        %v423 = vsel %vm408, %v421, 0.0
        %v424 = vadd.f32 %v422, %v423
        %v425 = vrot.slane %v424, 4
        %v426 = vadd.f32 %v424, %v425
        %v427 = vrot.slane %v426, 2
        %v428 = vadd.f32 %v426, %v427
        %v429 = vrot.slane %v428, 1
        %v430 = vadd.f32 %v428, %v429
        %432 = vrot.lane.b32.xlu0 %v430, 64
        %v433 = vpop.permute.xlu0 %432
        %v435 = vsel %vm408, %v419, %v433
        %436 = vst [vmem:[%s200] sm:$0x1] %v435
        %s437 = sand.u32 %s98, 1
        %s438 = scalar_lea.sflag [#allocation3], %s437
        %s439 = sand.u32 %s98, 1
        %s440 = smul.addr %s439, 16
        %s441 = scalar_lea.vmem [#allocation2], %s440
        %s442 = sand.u32 %s124, 1
        %s443 = scalar_lea.sflag [#allocation5], %s442
        %s444 = sand.u32 %s124, 1
        %s445 = scalar_lea.vmem [#allocation4], %s444
        // Predicated region
        $region33: #{tpu_custom_call.1} parent=31 // pred_check
          %p446 = pneg %p108
        $region34: #{tpu_custom_call.1} parent=31 // pred_check_branch
          %448 = sbr.rel (%p446) target = $region36
        $region35: #{tpu_custom_call.1} parent=31 // pred_region
          %450 = vsyncadd %s438, 0
          %s451 = smul.addr %s22, 2
          %s452 = smul.addr %s451, 8
          %s453 = scalar_lea.hbm %s3, %s452
          %s454 = sshll.u32 %s441, 4
          %s455 = int_to_ptr.vmem [resolvable:$true] %s454
          %s456 = sshll.u32 %s453, 4
          %s457 = int_to_ptr.hbm [resolvable:$true] %s456
          %462 = dma.vmem_to_hbm [thread:$0]  %s455, 256, %s457, %s438, 128, 128, 8
        $region36: #{tpu_custom_call.1} parent=31 // pred_fallthru
          _
        // Predicated region
        $region37: #{tpu_custom_call.1} parent=31 // pred_check
          %p463 = pneg %p134
        $region38: #{tpu_custom_call.1} parent=31 // pred_check_branch
          %465 = sbr.rel (%p463) target = $region40
        $region39: #{tpu_custom_call.1} parent=31 // pred_region
          %467 = vsyncadd %s443, 0
          %s468 = scalar_lea.hbm %s4, %s22
          %s470 = sshll.u32 %s445, 4
          %s471 = int_to_ptr.vmem [resolvable:$true] %s470
          %s472 = sshll.u32 %s468, 4
          %s473 = int_to_ptr.hbm [resolvable:$true] %s472
          %475 = dma.vmem_to_hbm [thread:$0]  %s471, 16, %s473, %s443
        $region40: #{tpu_custom_call.1} parent=31 // pred_fallthru
          _
      $region32: #{tpu_custom_call.1} parent=5 // pred_fallthru
        _
      %p476 = scmp.le.s32.totalorder 2, %s17
      // Predicated region
      $region41: #{tpu_custom_call.1} parent=5 // pred_check
        %p477 = pneg %p476
      $region42: #{tpu_custom_call.1} parent=5 // pred_check_branch
        %479 = sbr.rel (%p477) target = $region44
      $region43: #{tpu_custom_call.1} parent=5 // pred_region
        %s480 = ssub.s32 %s17, 2
        // Predicated region
        $region45: #{tpu_custom_call.1} parent=43 // pred_check
          %p481 = pneg %p114
        $region46: #{tpu_custom_call.1} parent=43 // pred_check_branch
          %483 = sbr.rel (%p481) target = $region48
        $region47: #{tpu_custom_call.1} parent=43 // pred_region
          %s484 = sand.u32 %s99, 1
          %s485 = scalar_lea.sflag [#allocation3], %s484
          %s486 = sand.u32 %s99, 1
          %s487 = smul.addr %s486, 16
          %s488 = scalar_lea.vmem [#allocation2], %s487
          %490 = dma.done %s485, 256
        $region48: #{tpu_custom_call.1} parent=43 // pred_fallthru
          _
        // Predicated region
        $region49: #{tpu_custom_call.1} parent=43 // pred_check
          %p491 = pneg %p140
        $region50: #{tpu_custom_call.1} parent=43 // pred_check_branch
          %493 = sbr.rel (%p491) target = $region52
        $region51: #{tpu_custom_call.1} parent=43 // pred_region
          %s494 = sand.u32 %s125, 1
          %s495 = scalar_lea.sflag [#allocation5], %s494
          %s496 = sand.u32 %s125, 1
          %s497 = scalar_lea.vmem [#allocation4], %s496
          %499 = dma.done %s495, 16
        $region52: #{tpu_custom_call.1} parent=43 // pred_fallthru
          _
      $region44: #{tpu_custom_call.1} parent=5 // pred_fallthru
        _
    $region6: #{tpu_custom_call.1} parent=1 // loop_footer
      %s21 = sadd.s32 1, %s17
    $region7: #{tpu_custom_call.1} parent=1 // loop_footer_branch
      %16 = sbr.rel target = $region3
    $region8: #{tpu_custom_call.1} parent=1 // loop_exit
      _
    %500 = vsyncpa [#allocation3], 1
    %s501 = scalar_lea.sflag [#allocation3], 1
    %502 = vsyncpa %s501, 1
    %503 = vsyncpa [#allocation5], 1
    %s504 = scalar_lea.sflag [#allocation5], 1
    %505 = vsyncpa %s504, 1

</llo_original>
